<compile_context>
chip_gen: v5e
topology: v5e:2x2
jax: 0.10.0
libtpu: 0.0.40
codegen_flags: <defaults>
</compile_context>

<pallas_src>
import jax
import jax.numpy as jnp
from jax.experimental import pallas as pl
from jax.experimental.pallas import tpu as pltpu


# ----------------------------------------------------------------------------
# Production forward path: identity return (no kernel launch, zero overhead).
# ----------------------------------------------------------------------------
def scalar_forward(value: jax.Array) -> jax.Array:
    """Equivalent of Scalar.forward(): returns the scalar parameter, shape (1,).

    Plain return is a no-op for XLA.  Downstream Pallas kernels should consume
    this value via an SMEM in_spec or `PrefetchScalarGridSpec` scalar-prefetch
    arg (see `scale_by_scalar_demo`), never via a standalone scalar kernel.
    """
    return value


# ----------------------------------------------------------------------------
# TEST-ONLY Pallas identity kernel (SMEM scalar path, no grid, no aliasing).
# Not used in production; exists to validate the SMEM scalar plumbing.
# ----------------------------------------------------------------------------
def _scalar_identity_kernel(val_ref, out_ref):
    # One sld + one sst on the scalar unit; no vector traffic.
    out_ref[0] = val_ref[0]


def scalar_forward_pallas(value: jax.Array) -> jax.Array:
    """Test-only Pallas variant of Scalar.forward(). Prefer `scalar_forward`."""
    assert value.shape == (1,), "Scalar parameter must have shape (1,)"
    return pl.pallas_call(
        _scalar_identity_kernel,
        out_shape=jax.ShapeDtypeStruct(value.shape, value.dtype),
        in_specs=[pl.BlockSpec(memory_space=pltpu.MemorySpace.SMEM)],
        out_specs=pl.BlockSpec(memory_space=pltpu.MemorySpace.SMEM),
    )(value)


# ----------------------------------------------------------------------------
# Recommended downstream-consumption pattern: the scalar arrives in the
# consumer kernel's SMEM directly; the broadcast against the large tensor
# happens inside the kernel (never materialized in HBM).
# ----------------------------------------------------------------------------
def _scale_kernel(scale_ref, x_ref, o_ref):
    # scale_ref lives in SMEM; read once, broadcast implicitly on the VPU.
    o_ref[...] = x_ref[...] * scale_ref[0]


def scale_by_scalar_demo(scale: jax.Array, x: jax.Array) -> jax.Array:
    """Example consumer: y = scale * x with the scalar fed through SMEM."""
    assert scale.shape == (1,)
    m, n = x.shape
    return pl.pallas_call(
        _scale_kernel,
        out_shape=jax.ShapeDtypeStruct(x.shape, x.dtype),
        in_specs=[
            pl.BlockSpec(memory_space=pltpu.MemorySpace.SMEM),  # the scalar
            pl.BlockSpec((m, n), lambda: (0, 0)),               # full block in VMEM
        ],
        out_specs=pl.BlockSpec((m, n), lambda: (0, 0)),
    )(scale, x)


# ----------------------------------------------------------------------------
# JAX counterpart of the PyTorch `Scalar` module.
# ----------------------------------------------------------------------------
class ScalarPallas:
    def __init__(self, val: float = 0.0):
        # Matches torch.Tensor([val]) default dtype (float32).
        self.value = jnp.array([val], dtype=jnp.float32)

    def __call__(self) -> jax.Array:
        # Zero-overhead forward (identical semantics to nn.Module.forward).
        return scalar_forward(self.value)

    def forward_pallas(self) -> jax.Array:
        # Test-only explicit Pallas path.
        return scalar_forward_pallas(self.value)


if __name__ == "__main__":
    # The module takes no forward inputs; derive a deterministic init value
    # from PRNGKey(0).
    key = jax.random.PRNGKey(0)
    k_val, k_x = jax.random.split(key)
    init_val = float(jax.random.normal(k_val, ()).item())

    module = ScalarPallas(val=init_val)
    expected = jnp.array([init_val], dtype=jnp.float32)

    # 1) Production (kernel-free) forward path.
    out_fast = module()
    jax.block_until_ready(out_fast)
    assert out_fast.shape == (1,)
    assert jnp.allclose(out_fast, expected)

    # 2) Test-only Pallas SMEM identity kernel.
    out_pallas = module.forward_pallas()
    jax.block_until_ready(out_pallas)
    assert out_pallas.shape == (1,)
    assert jnp.allclose(out_pallas, expected)

    # 3) Recommended downstream consumption pattern: scalar fed via SMEM into
    #    a consumer kernel that does the broadcast in-kernel.
    x = jax.random.normal(k_x, (8, 128), dtype=jnp.float32)
    y = scale_by_scalar_demo(module(), x)
    jax.block_until_ready(y)
    assert jnp.allclose(y, x * init_val, rtol=1e-6, atol=1e-6)

    print("KERNEL_OK")
</pallas_src>

<mosaic_0001>
module attributes {stable_mosaic.version = 11 : i64} {
  func.func @_scalar_identity_kernel(%arg0: memref<1xf32, #tpu.memory_space<smem>>, %arg1: memref<1xf32, #tpu.memory_space<smem>>) attributes {dimension_semantics = [], scalar_prefetch = 0 : i64, scratch_operands = 0 : i64, tpu.core_type = #tpu.core_type<tc>} {
    %c0 = arith.constant 0 : index
    %0 = memref.load %arg0[%c0] : memref<1xf32, #tpu.memory_space<smem>>
    %c0_0 = arith.constant 0 : index
    %1 = memref.load %arg1[%c0_0] : memref<1xf32, #tpu.memory_space<smem>>
    memref.store %0, %arg1[%c0_0] : memref<1xf32, #tpu.memory_space<smem>>
    return
  }
}

</mosaic_0001>

<llo_original>
// kernel: tpu_custom_call.1
$region0: #{tpu_custom_call.1}
  #allocation0 [shape = 'u32[]', space=smem, size = 0x4, offset = 0x4, fixed_abs, tag = 'smem constant byte address 0x4 - core index']
  #allocation1 [shape = 'u32[72,128]{1,0:T(1,128)}', space=vmem, size = 0x9000, scoped, tag = 'internal scratch']
  #allocation2 [shape = 'f32[1]{0:T(128)S(6)}', space=smem, size = 0x200, scoped, tag = 'scoped memory for tpu_custom_call.1']
  %s0 = inlined_call_operand.<no memory space> [shape: f32[1], index: 0, kind: input, shape index: {}]
  %s1 = inlined_call_operand.hbm [shape: f32[1], index: 1, kind: output, shape index: {}]
  %s2 = sld [smem:[#allocation0]]
  $region14: #{tpu_custom_call.1} parent=0
    _
  %s4 = ssub.s32 1, %s2
  %s5 = scalar_select 0, %s4, %s2
  %6 = sst [smem:[#allocation2]] %s0
  $region1: #{tpu_custom_call.1} parent=0
    #allocation3 [shape = 'u8[512]{0}', space=smem, size = 0x200, scoped, tag = 'output window, operand 0, single buffered']
    #allocation4 [shape = 's32[1]{0}', space=sflag, size = 0x4, scoped, tag = 'scoped memory for tpu_custom_call.1']
    %7 = vsyncpa [#allocation4], 0
    // Predicated region
    $region2: #{tpu_custom_call.1} parent=1 // pred_check
      _
    $region3: #{tpu_custom_call.1} parent=1 // pred_check_branch
      %9 = sbr.rel (0) target = $region5
    $region4: #{tpu_custom_call.1} parent=1 // pred_region
      _
    $region5: #{tpu_custom_call.1} parent=1 // pred_fallthru
      _
    %s10 = sld [smem:[#allocation2]]
    %s11 = scalar_lea.smem [#allocation3], 0
    %12 = sst [smem:[%s11]] %s10
    // Predicated region
    $region6: #{tpu_custom_call.1} parent=1 // pred_check
      _
    $region7: #{tpu_custom_call.1} parent=1 // pred_check_branch
      %14 = sbr.rel (0) target = $region9
    $region8: #{tpu_custom_call.1} parent=1 // pred_region
      %16 = vsyncadd [#allocation4], 0
      %s18 = sshll.u32 %s1, 4
      %s19 = int_to_ptr.hbm [resolvable:$true] %s18
      %21 = dma.smem_to_hbm [#allocation3], 16, %s19, [#allocation4]
    $region9: #{tpu_custom_call.1} parent=1 // pred_fallthru
      _
    // Predicated region
    $region10: #{tpu_custom_call.1} parent=1 // pred_check
      _
    $region11: #{tpu_custom_call.1} parent=1 // pred_check_branch
      %23 = sbr.rel (0) target = $region13
    $region12: #{tpu_custom_call.1} parent=1 // pred_region
      %25 = dma.done [#allocation4], 16
    $region13: #{tpu_custom_call.1} parent=1 // pred_fallthru
      _
    %26 = sfence
    %27 = vsyncpa [#allocation4], 1

</llo_original>
